<compile_context>
chip_gen: v7x
topology: tpu7x:2x2x1
jax: 0.10.0
libtpu: 0.0.40
codegen_flags: <defaults>
</compile_context>

<pallas_src>
import functools

import jax
import jax.numpy as jnp
from jax.experimental import pallas as pl
from jax.experimental.pallas import tpu as pltpu


def _vert_loss_kernel(pred_ref, gt_ref, valid_ref, out_ref, *, weight):
    # pred/gt/out blocks: (cout, blk); valid block: (1, blk) -> broadcasts
    # over the cout sublanes.  Pure VPU elementwise, full-lane stores.
    diff = jnp.abs(gt_ref[...] - pred_ref[...])
    out_ref[...] = (weight * valid_ref[...] * diff).astype(out_ref.dtype)


def vert_loss(pred_verts, gt_verts, vert_valid, *, weight=0.001, is2D=True,
              lane_block=4096, min_pallas_elems=1 << 16, force_pallas=False):
    """Pallas implementation of VertLoss.forward.

    pred_verts, gt_verts : (B, V, C) float
    vert_valid           : (B, V, 1) or (B, V) mask (any dtype; cast to float)
    returns              : (B, V, 2) if is2D else (B, V, C)
    """
    B, V, C = pred_verts.shape
    cout = 2 if is2D else C
    dtype = pred_verts.dtype

    if vert_valid.ndim == 2:
        vert_valid = vert_valid[:, :, None]
    valid = vert_valid.astype(dtype)

    # Tiny inputs: Pallas fixed overhead dominates; let XLA fuse it.
    if not force_pallas and B * V * cout < min_pallas_elems:
        loss = weight * valid * jnp.abs(gt_verts - pred_verts)
        return loss[:, :, :cout]

    n = B * V

    # Slice channels in the wrapper (cuts HBM traffic for is2D), then
    # re-layout so the big flattened B*V axis lands on the lane dimension.
    pred2 = jnp.transpose(pred_verts[:, :, :cout], (2, 0, 1)).reshape(cout, n)
    gt2 = jnp.transpose(gt_verts[:, :, :cout], (2, 0, 1)).reshape(cout, n)
    valid2 = valid.reshape(1, n)  # (B, V, 1) -> (1, B*V)

    # Lane block: multiple of 128, capped at `lane_block`.
    blk = min(lane_block, ((n + 127) // 128) * 128)
    num_blocks = pl.cdiv(n, blk)
    n_pad = num_blocks * blk
    if n_pad != n:
        pad = ((0, 0), (0, n_pad - n))
        pred2 = jnp.pad(pred2, pad)
        gt2 = jnp.pad(gt2, pad)
        valid2 = jnp.pad(valid2, pad)

    kernel = functools.partial(_vert_loss_kernel, weight=weight)

    out2 = pl.pallas_call(
        kernel,
        out_shape=jax.ShapeDtypeStruct((cout, n_pad), dtype),
        grid_spec=pltpu.PrefetchScalarGridSpec(
            num_scalar_prefetch=0,
            grid=(num_blocks,),
            in_specs=[
                pl.BlockSpec((cout, blk), lambda i: (0, i)),
                pl.BlockSpec((cout, blk), lambda i: (0, i)),
                pl.BlockSpec((1, blk), lambda i: (0, i)),
            ],
            out_specs=pl.BlockSpec((cout, blk), lambda i: (0, i)),
        ),
        compiler_params=pltpu.CompilerParams(
            dimension_semantics=("parallel",),  # megacore split on v7x
        ),
    )(pred2, gt2, valid2)

    # Strip lane padding and restore (B, V, cout).
    return out2[:, :n].reshape(cout, B, V).transpose(1, 2, 0)


def _vert_loss_ref(pred_verts, gt_verts, vert_valid, *, weight=0.001, is2D=True):
    loss = weight * vert_valid * jnp.abs(gt_verts - pred_verts)
    return loss[:, :, :2] if is2D else loss


if __name__ == "__main__":
    key = jax.random.PRNGKey(0)
    k1, k2, k3 = jax.random.split(key, 3)

    # Small shapes consistent with the module: (batch, num_vertices, coords).
    B, V, C = 2, 16, 3
    pred = jax.random.normal(k1, (B, V, C), dtype=jnp.float32)
    gt = jax.random.normal(k2, (B, V, C), dtype=jnp.float32)
    valid = (jax.random.uniform(k3, (B, V, 1)) > 0.3).astype(jnp.float32)

    # Force the Pallas path at this small size so the kernel is exercised.
    out = jax.block_until_ready(
        vert_loss(pred, gt, valid, weight=0.001, is2D=True, force_pallas=True))
    ref = _vert_loss_ref(pred, gt, valid, weight=0.001, is2D=True)
    assert out.shape == (B, V, 2), out.shape
    assert jnp.allclose(out, ref, atol=1e-6, rtol=1e-6), "mismatch vs reference (2D)"

    # is2D=False path.
    out3 = jax.block_until_ready(
        vert_loss(pred, gt, valid, weight=0.001, is2D=False, force_pallas=True))
    ref3 = _vert_loss_ref(pred, gt, valid, weight=0.001, is2D=False)
    assert out3.shape == (B, V, C), out3.shape
    assert jnp.allclose(out3, ref3, atol=1e-6, rtol=1e-6), "mismatch vs reference (3D)"

    # Medium size: exercises multi-block grid + lane padding (B*V=10000 -> 3 blocks).
    B2, V2 = 2, 5000
    p2 = jax.random.normal(k1, (B2, V2, C), dtype=jnp.float32)
    g2 = jax.random.normal(k2, (B2, V2, C), dtype=jnp.float32)
    v2 = (jax.random.uniform(k3, (B2, V2, 1)) > 0.3).astype(jnp.float32)
    outm = jax.block_until_ready(
        vert_loss(p2, g2, v2, weight=0.001, is2D=True, force_pallas=True))
    refm = _vert_loss_ref(p2, g2, v2, weight=0.001, is2D=True)
    assert outm.shape == (B2, V2, 2)
    assert jnp.allclose(outm, refm, atol=1e-6, rtol=1e-6), "mismatch vs reference (tiled)"

    # Default dispatcher at tiny size -> XLA fused fallback.
    outs = jax.block_until_ready(vert_loss(pred, gt, valid, weight=0.001, is2D=True))
    assert jnp.allclose(outs, ref, atol=1e-6, rtol=1e-6), "mismatch vs reference (fallback)"

    print("KERNEL_OK")
</pallas_src>

<mosaic_0001>
module attributes {stable_mosaic.version = 11 : i64} {
  func.func @_vert_loss_kernel(%arg0: i32, %arg1: memref<2x128xf32, #tpu.memory_space<vmem>>, %arg2: memref<2x128xf32, #tpu.memory_space<vmem>>, %arg3: memref<1x128xf32, #tpu.memory_space<vmem>>, %arg4: memref<2x128xf32, #tpu.memory_space<vmem>>) attributes {dimension_semantics = [#tpu.dimension_semantics<parallel>], iteration_bounds = array<i64: 1>, scalar_prefetch = 0 : i64, scratch_operands = 0 : i64, tpu.core_type = #tpu.core_type<tc>, window_params = [{transform_indices = @transform_0, window_bounds = array<i64: 2, 128>}, {transform_indices = @transform_1, window_bounds = array<i64: 2, 128>}, {transform_indices = @transform_2, window_bounds = array<i64: 1, 128>}, {transform_indices = @transform_3, window_bounds = array<i64: 2, 128>}]} {
    %c0 = arith.constant 0 : index
    %c0_0 = arith.constant 0 : index
    %0 = vector.load %arg2[%c0, %c0_0] : memref<2x128xf32, #tpu.memory_space<vmem>>, vector<2x128xf32>
    %c0_1 = arith.constant 0 : index
    %c0_2 = arith.constant 0 : index
    %1 = vector.load %arg1[%c0_1, %c0_2] : memref<2x128xf32, #tpu.memory_space<vmem>>, vector<2x128xf32>
    %2 = arith.subf %0, %1 : vector<2x128xf32>
    %3 = math.absf %2 : vector<2x128xf32>
    %c0_3 = arith.constant 0 : index
    %c0_4 = arith.constant 0 : index
    %4 = vector.load %arg3[%c0_3, %c0_4] : memref<1x128xf32, #tpu.memory_space<vmem>>, vector<1x128xf32>
    %cst = arith.constant 1.000000e-03 : f32
    %5 = vector.broadcast %cst : f32 to vector<1x128xf32>
    %6 = arith.mulf %5, %4 : vector<1x128xf32>
    %7 = vector.broadcast %6 : vector<1x128xf32> to vector<2x128xf32>
    %8 = arith.mulf %7, %3 : vector<2x128xf32>
    %c0_5 = arith.constant 0 : index
    %c0_6 = arith.constant 0 : index
    %9 = vector.load %arg4[%c0_5, %c0_6] : memref<2x128xf32, #tpu.memory_space<vmem>>, vector<2x128xf32>
    tpu.vector_store %arg4[%c0_5, %c0_6], %8 {strides = array<i32>} : memref<2x128xf32, #tpu.memory_space<vmem>>, vector<2x128xf32>,
    return
  }
  func.func @transform_0(%arg0: i32) -> (i32, i32) {
    %c0_i32 = arith.constant 0 : i32
    %c0_i32_0 = arith.constant 0 : i32
    return %c0_i32, %arg0 : i32, i32
  }
  func.func @transform_1(%arg0: i32) -> (i32, i32) {
    %c0_i32 = arith.constant 0 : i32
    %c0_i32_0 = arith.constant 0 : i32
    return %c0_i32, %arg0 : i32, i32
  }
  func.func @transform_2(%arg0: i32) -> (i32, i32) {
    %c0_i32 = arith.constant 0 : i32
    %c0_i32_0 = arith.constant 0 : i32
    return %c0_i32, %arg0 : i32, i32
  }
  func.func @transform_3(%arg0: i32) -> (i32, i32) {
    %c0_i32 = arith.constant 0 : i32
    %c0_i32_0 = arith.constant 0 : i32
    return %c0_i32, %arg0 : i32, i32
  }
}

</mosaic_0001>

<llo_original>
// kernel: tpu_custom_call.1
$region0: #{tpu_custom_call.1}
  #allocation0 [shape = 'u32[]', space=smem, size = 0x4, offset = 0x4, fixed_abs, tag = 'smem constant byte address 0x4 - core index']
  #allocation1 [shape = 'u32[144,128]{1,0:T(1,128)}', space=vmem, size = 0x12000, scoped, tag = 'internal scratch']
  %s0 = inlined_call_operand.hbm [shape: f32[2,128], index: 0, kind: input, shape index: {}]
  %s1 = inlined_call_operand.vmem [shape: f32[2,128], index: 1, kind: input, shape index: {}]
  %s2 = inlined_call_operand.vmem [shape: f32[1,128], index: 2, kind: input, shape index: {}]
  %s3 = inlined_call_operand.hbm [shape: f32[2,128], index: 3, kind: output, shape index: {}]
  %s4 = sld [smem:[#allocation0]]
  $region26: #{tpu_custom_call.1} parent=0
    _
  %s6 = ssub.s32 1, %s4
  %s7 = scalar_select 0, %s6, %s4
  $region1: #{tpu_custom_call.1} parent=0
    #allocation2 [shape = 'u8[1024]{0}', space=vmem, size = 0x400, scoped, tag = 'input window, operand 0, single buffered']
    #allocation3 [shape = 's32[1]{0}', space=sflag, size = 0x4, scoped, tag = 'scoped memory for tpu_custom_call.1']
    #allocation4 [shape = 's32[1]{0}', space=sflag, size = 0x4, scoped, tag = 'scoped memory for tpu_custom_call.1']
    #allocation5 [shape = 'u8[1024]{0}', space=vmem, size = 0x400, scoped, tag = 'output window, operand 0, single buffered']
    %8 = vsyncpa [#allocation3], 0
    %9 = vsyncpa [#allocation4], 0
    // Predicated region
    $region2: #{tpu_custom_call.1} parent=1 // pred_check
      _
    $region3: #{tpu_custom_call.1} parent=1 // pred_check_branch
      %11 = sbr.rel (0) target = $region5
    $region4: #{tpu_custom_call.1} parent=1 // pred_region
      %s13 = ssub.s32 32, 32
      %14 = vsyncadd [#allocation3], %s13
      %s16 = sshll.u32 [#allocation2], 4
      %s17 = int_to_ptr.vmem [resolvable:$true] %s16
      %19 = dma.hbm_to_vmem [thread:$0]  %s0, 32, %s17, [#allocation3]
    $region5: #{tpu_custom_call.1} parent=1 // pred_fallthru
      _
    // Predicated region
    $region6: #{tpu_custom_call.1} parent=1 // pred_check
      _
    $region7: #{tpu_custom_call.1} parent=1 // pred_check_branch
      %21 = sbr.rel (0) target = $region9
    $region8: #{tpu_custom_call.1} parent=1 // pred_region
      _
    $region9: #{tpu_custom_call.1} parent=1 // pred_fallthru
      _
    // Predicated region
    $region10: #{tpu_custom_call.1} parent=1 // pred_check
      _
    $region11: #{tpu_custom_call.1} parent=1 // pred_check_branch
      %23 = sbr.rel (0) target = $region13
    $region12: #{tpu_custom_call.1} parent=1 // pred_region
      _
    $region13: #{tpu_custom_call.1} parent=1 // pred_fallthru
      _
    // Predicated region
    $region14: #{tpu_custom_call.1} parent=1 // pred_check
      _
    $region15: #{tpu_custom_call.1} parent=1 // pred_check_branch
      %25 = sbr.rel (0) target = $region17
    $region16: #{tpu_custom_call.1} parent=1 // pred_region
      %26 = dma.done [#allocation3], 32
    $region17: #{tpu_custom_call.1} parent=1 // pred_fallthru
      _
    %v27 = vld [vmem:[%s1] sm:$0x3]
    %v28 = vld [vmem:[#allocation2] sm:$0x3]
    %v29 = vsub.f32 %v27, %v28
    %v30 = vand.u32 2147483647, %v29
    %v31 = vld [vmem:[%s2] sm:$0x1]
    %v32 = vmul.f32 %v31, 0.001
    %v34 = vlaneseq
    %v35 = vshrl.u32 %v34, 7
    %v36 = vsub.s32 0, %v35
    %v37 = vrot.slane %v32, %v36
    %v39 = vmul.f32 %v37, %v30
    %40 = vst [vmem:[#allocation5] sm:$0x3] %v39
    // Predicated region
    $region18: #{tpu_custom_call.1} parent=1 // pred_check
      _
    $region19: #{tpu_custom_call.1} parent=1 // pred_check_branch
      %42 = sbr.rel (0) target = $region21
    $region20: #{tpu_custom_call.1} parent=1 // pred_region
      %s44 = ssub.s32 32, 32
      %45 = vsyncadd [#allocation4], %s44
      %s47 = sshll.u32 [#allocation5], 4
      %s48 = int_to_ptr.vmem [resolvable:$true] %s47
      %50 = dma.vmem_to_hbm [thread:$0]  %s48, 32, %s3, [#allocation4]
    $region21: #{tpu_custom_call.1} parent=1 // pred_fallthru
      _
    // Predicated region
    $region22: #{tpu_custom_call.1} parent=1 // pred_check
      _
    $region23: #{tpu_custom_call.1} parent=1 // pred_check_branch
      %52 = sbr.rel (0) target = $region25
    $region24: #{tpu_custom_call.1} parent=1 // pred_region
      %53 = dma.done [#allocation4], 32
    $region25: #{tpu_custom_call.1} parent=1 // pred_fallthru
      _
    %54 = vsyncpa [#allocation3], 1
    %55 = vsyncpa [#allocation4], 1

</llo_original>
